<compile_context>
chip_gen: v6e
topology: v6e:2x2x1
jax: 0.10.0
libtpu: 0.0.40
codegen_flags: <defaults>
</compile_context>

<pallas_src>
import functools

import jax
import jax.numpy as jnp
from jax.experimental import pallas as pl
from jax.experimental.pallas import tpu as pltpu


def _round_up(n, m):
    return ((n + m - 1) // m) * m


def clf_block_kernel(x_ref, w1t_ref, b1_ref, w2t_ref, b2_ref, out_ref,
                     *, tau, v_threshold, n_steps, batch_p):
    # ---- linear_1 for ALL timesteps in one MXU matmul -----------------------
    # x_ref: [T*Bp, D] (f32 or bf16), w1t_ref: [D, D]; accumulate in f32.
    # (LIF state does not feed linear_1, so time can be batched.)
    h1 = jnp.dot(x_ref[...], w1t_ref[...],
                 preferred_element_type=jnp.float32) + b1_ref[...]

    d = h1.shape[1]
    v = jnp.zeros((batch_p, d), jnp.float32)
    spike_sum = jnp.zeros((batch_p, d), jnp.float32)

    # ---- sequential LIF recurrence (hard reset, v_reset = 0), f32 -----------
    #   h = v + (x - v) / tau ; spike = (h >= v_th) ; v = 0 where spiked else h
    # T is small and static -> fully unrolled; slices are static & 8-row
    # (sublane) aligned because batch_p is a multiple of 8.
    for t in range(n_steps):
        ht = h1[t * batch_p:(t + 1) * batch_p, :]
        h = v + (ht - v) * (1.0 / tau)
        fired = h >= v_threshold
        spike_sum = spike_sum + jnp.where(fired, 1.0, 0.0)
        v = jnp.where(fired, 0.0, h)

    # ---- linear_2 once on the time-mean of spikes ---------------------------
    # spike_mean is a multiple of 1/T -> exact in bf16 if the MXU path is bf16.
    spike_mean = spike_sum * (1.0 / n_steps)
    logits = jnp.dot(spike_mean.astype(w2t_ref.dtype), w2t_ref[...],
                     preferred_element_type=jnp.float32) + b2_ref[...]

    # ---- log_softmax over class dim (padded cols carry -1e30 bias) ----------
    mx = jnp.max(logits, axis=1, keepdims=True)
    sh = logits - mx
    lse = jnp.log(jnp.sum(jnp.exp(sh), axis=1, keepdims=True))
    out_ref[...] = sh - lse


def prepare_clf_params(w1, b1, w2, b2, *, mxu_dtype=jnp.float32):
    """One-time parameter prep (hoisted out of the per-call forward path).

    PyTorch nn.Linear stores W as [out, in]; pre-transpose so the kernel does
    x @ W^T.  Only the class (lane) dim is padded to 128 for a lane-dense
    output store; padded class columns get a -1e30 bias so they vanish under
    log_softmax.  The contraction dim D is left unpadded.  Set
    mxu_dtype=jnp.bfloat16 on v6e/v7x for native-bf16 MXU operands.
    """
    D = w1.shape[1]
    C = w2.shape[0]
    Cp = _round_up(C, 128)

    w1t = jnp.asarray(w1, jnp.float32).T.astype(mxu_dtype)            # [D, D]
    b1r = jnp.asarray(b1, jnp.float32).reshape(1, D)                  # [1, D]
    w2t = (jnp.zeros((D, Cp), jnp.float32)
           .at[:, :C].set(jnp.asarray(w2, jnp.float32).T)).astype(mxu_dtype)
    b2r = jnp.full((1, Cp), -1e30, jnp.float32).at[:, :C].set(
        jnp.asarray(b2, jnp.float32))                                 # [1, Cp]
    return w1t, b1r, w2t, b2r


@functools.partial(jax.jit, static_argnames=("num_classes", "tau", "v_threshold"))
def clf_block_forward(x, w1t, b1, w2t, b2, *, num_classes,
                      tau=2.0, v_threshold=1.0):
    T, B, D = x.shape
    Cp = w2t.shape[1]
    Bp = _round_up(B, 8)

    # Pad batch to a sublane multiple (zero rows never contaminate valid rows
    # and are sliced off below); cast x to the MXU operand dtype of W1.
    x_f = x.astype(jnp.float32)
    if B != Bp:
        x_f = jnp.zeros((T, Bp, D), jnp.float32).at[:, :B, :].set(x_f)
    x2d = x_f.reshape(T * Bp, D).astype(w1t.dtype)

    kernel = functools.partial(clf_block_kernel, tau=tau,
                               v_threshold=v_threshold,
                               n_steps=T, batch_p=Bp)

    out_p = pl.pallas_call(
        kernel,
        out_shape=jax.ShapeDtypeStruct((Bp, Cp), jnp.float32),
        # Single invocation, no grid: whole operands resident in VMEM once,
        # no pipeline double-buffering.  Blocks equal the full array dims, so
        # the (8,128) divisibility rule does not apply.
        in_specs=[pl.BlockSpec(memory_space=pltpu.MemorySpace.VMEM)] * 5,
        out_specs=pl.BlockSpec(memory_space=pltpu.MemorySpace.VMEM),
    )(x2d, w1t, b1, w2t, b2)

    # Strip padding outside the kernel (keeps the in-kernel store lane-dense).
    return out_p[:B, :num_classes]


def clf_block_reference(x, w1, b1, w2, b2, *, tau=2.0, v_th=1.0):
    """Pure-JAX reference with the PyTorch / spikingjelly forward semantics."""
    h1 = jnp.einsum("tbd,od->tbo", x, w1) + b1

    def step(v, ht):
        h = v + (ht - v) / tau
        s = (h >= v_th).astype(jnp.float32)
        return jnp.where(s > 0, 0.0, h), s

    v0 = jnp.zeros((x.shape[1], w1.shape[0]), jnp.float32)
    _, spikes = jax.lax.scan(step, v0, h1)
    y = jnp.einsum("tbd,cd->tbc", spikes, w2) + b2
    return jax.nn.log_softmax(y.mean(axis=0), axis=1)


if __name__ == "__main__":
    T, B, D, C = 8, 4, 32, 10   # time steps, batch, ipt_dim, opt_classes

    key = jax.random.PRNGKey(0)
    kx, kw1, kb1, kw2, kb2 = jax.random.split(key, 5)

    x = jax.random.normal(kx, (T, B, D), dtype=jnp.float32)
    # Deterministic synthetic params (uniform, torch-Linear-like scale).
    lim = 1.0 / jnp.sqrt(jnp.float32(D))
    w1 = jax.random.uniform(kw1, (D, D), jnp.float32, -lim, lim)
    b1 = jax.random.uniform(kb1, (D,), jnp.float32, -lim, lim)
    w2 = jax.random.uniform(kw2, (C, D), jnp.float32, -lim, lim)
    b2 = jax.random.uniform(kb2, (C,), jnp.float32, -lim, lim)

    expected = clf_block_reference(x, w1, b1, w2, b2)

    # ---- f32 MXU-operand path (matches the PyTorch forward within 1e-4) -----
    params_f32 = prepare_clf_params(w1, b1, w2, b2, mxu_dtype=jnp.float32)
    out = clf_block_forward(x, *params_f32, num_classes=C)
    jax.block_until_ready(out)
    assert out.shape == (B, C)
    assert jnp.allclose(out, expected, atol=1e-4, rtol=1e-4), (out, expected)

    # ---- bf16 MXU-operand path (the v6e/v7x recommendation) -----------------
    # Weight rounding (and possible spike flips for pre-activations within
    # ~2^-8 of v_th) loosens the numerical contract, so only structural checks
    # here: shape, finiteness, and valid log-probability rows.
    params_bf16 = prepare_clf_params(w1, b1, w2, b2, mxu_dtype=jnp.bfloat16)
    out_bf16 = clf_block_forward(x, *params_bf16, num_classes=C)
    jax.block_until_ready(out_bf16)
    assert out_bf16.shape == (B, C)
    assert bool(jnp.all(jnp.isfinite(out_bf16)))
    assert jnp.allclose(jnp.sum(jnp.exp(out_bf16), axis=1), 1.0, atol=1e-3)

    print("KERNEL_OK")
</pallas_src>

<mosaic_0001>
module attributes {stable_mosaic.version = 11 : i64} {
  func.func @clf_block_kernel(%arg0: memref<64x32xf32, #tpu.memory_space<vmem>>, %arg1: memref<32x32xf32, #tpu.memory_space<vmem>>, %arg2: memref<1x32xf32, #tpu.memory_space<vmem>>, %arg3: memref<32x128xf32, #tpu.memory_space<vmem>>, %arg4: memref<1x128xf32, #tpu.memory_space<vmem>>, %arg5: memref<8x128xf32, #tpu.memory_space<vmem>>) attributes {dimension_semantics = [], scalar_prefetch = 0 : i64, scratch_operands = 0 : i64, tpu.core_type = #tpu.core_type<tc>} {
    %c0 = arith.constant 0 : index
    %c0_0 = arith.constant 0 : index
    %0 = vector.load %arg0[%c0, %c0_0] : memref<64x32xf32, #tpu.memory_space<vmem>>, vector<64x32xf32>
    %c0_1 = arith.constant 0 : index
    %c0_2 = arith.constant 0 : index
    %1 = vector.load %arg1[%c0_1, %c0_2] : memref<32x32xf32, #tpu.memory_space<vmem>>, vector<32x32xf32>
    %cst = arith.constant dense<0.000000e+00> : vector<64x32xf32>
    %2 = tpu.matmul %0, %1, %cst {dimension_numbers = #tpu.dot_dimension_numbers<[1], [0], [0], [1], [0, 0, 1, 1], [], []>} : vector<64x32xf32>, vector<32x32xf32>, vector<64x32xf32> -> vector<64x32xf32>
    %c0_3 = arith.constant 0 : index
    %c0_4 = arith.constant 0 : index
    %3 = vector.load %arg2[%c0_3, %c0_4] : memref<1x32xf32, #tpu.memory_space<vmem>>, vector<1x32xf32>
    %4 = vector.broadcast %3 : vector<1x32xf32> to vector<64x32xf32>
    %5 = arith.addf %2, %4 : vector<64x32xf32>
    %cst_5 = arith.constant 0.000000e+00 : f32
    %6 = vector.broadcast %cst_5 : f32 to vector<8x32xf32>
    %cst_6 = arith.constant 0.000000e+00 : f32
    %7 = vector.broadcast %cst_6 : f32 to vector<8x32xf32>
    %8 = vector.extract_strided_slice %5 {offsets = [0, 0], sizes = [8, 32], strides = [1, 1]} : vector<64x32xf32> to vector<8x32xf32>
    %9 = arith.subf %8, %6 : vector<8x32xf32>
    %cst_7 = arith.constant 5.000000e-01 : f32
    %10 = vector.broadcast %cst_7 : f32 to vector<8x32xf32>
    %11 = arith.mulf %9, %10 : vector<8x32xf32>
    %12 = arith.addf %6, %11 : vector<8x32xf32>
    %cst_8 = arith.constant 1.000000e+00 : f32
    %13 = vector.broadcast %cst_8 : f32 to vector<8x32xf32>
    %14 = arith.cmpf oge, %12, %13 : vector<8x32xf32>
    %cst_9 = arith.constant 1.000000e+00 : f32
    %cst_10 = arith.constant 0.000000e+00 : f32
    %15 = vector.broadcast %cst_9 : f32 to vector<8x32xf32>
    %16 = vector.broadcast %cst_10 : f32 to vector<8x32xf32>
    %17 = arith.select %14, %15, %16 : vector<8x32xi1>, vector<8x32xf32>
    %18 = arith.addf %7, %17 : vector<8x32xf32>
    %cst_11 = arith.constant 0.000000e+00 : f32
    %19 = vector.broadcast %cst_11 : f32 to vector<8x32xf32>
    %20 = arith.select %14, %19, %12 : vector<8x32xi1>, vector<8x32xf32>
    %21 = vector.extract_strided_slice %5 {offsets = [8, 0], sizes = [8, 32], strides = [1, 1]} : vector<64x32xf32> to vector<8x32xf32>
    %22 = arith.subf %21, %20 : vector<8x32xf32>
    %cst_12 = arith.constant 5.000000e-01 : f32
    %23 = vector.broadcast %cst_12 : f32 to vector<8x32xf32>
    %24 = arith.mulf %22, %23 : vector<8x32xf32>
    %25 = arith.addf %20, %24 : vector<8x32xf32>
    %cst_13 = arith.constant 1.000000e+00 : f32
    %26 = vector.broadcast %cst_13 : f32 to vector<8x32xf32>
    %27 = arith.cmpf oge, %25, %26 : vector<8x32xf32>
    %cst_14 = arith.constant 1.000000e+00 : f32
    %cst_15 = arith.constant 0.000000e+00 : f32
    %28 = vector.broadcast %cst_14 : f32 to vector<8x32xf32>
    %29 = vector.broadcast %cst_15 : f32 to vector<8x32xf32>
    %30 = arith.select %27, %28, %29 : vector<8x32xi1>, vector<8x32xf32>
    %31 = arith.addf %18, %30 : vector<8x32xf32>
    %cst_16 = arith.constant 0.000000e+00 : f32
    %32 = vector.broadcast %cst_16 : f32 to vector<8x32xf32>
    %33 = arith.select %27, %32, %25 : vector<8x32xi1>, vector<8x32xf32>
    %34 = vector.extract_strided_slice %5 {offsets = [16, 0], sizes = [8, 32], strides = [1, 1]} : vector<64x32xf32> to vector<8x32xf32>
    %35 = arith.subf %34, %33 : vector<8x32xf32>
    %cst_17 = arith.constant 5.000000e-01 : f32
    %36 = vector.broadcast %cst_17 : f32 to vector<8x32xf32>
    %37 = arith.mulf %35, %36 : vector<8x32xf32>
    %38 = arith.addf %33, %37 : vector<8x32xf32>
    %cst_18 = arith.constant 1.000000e+00 : f32
    %39 = vector.broadcast %cst_18 : f32 to vector<8x32xf32>
    %40 = arith.cmpf oge, %38, %39 : vector<8x32xf32>
    %cst_19 = arith.constant 1.000000e+00 : f32
    %cst_20 = arith.constant 0.000000e+00 : f32
    %41 = vector.broadcast %cst_19 : f32 to vector<8x32xf32>
    %42 = vector.broadcast %cst_20 : f32 to vector<8x32xf32>
    %43 = arith.select %40, %41, %42 : vector<8x32xi1>, vector<8x32xf32>
    %44 = arith.addf %31, %43 : vector<8x32xf32>
    %cst_21 = arith.constant 0.000000e+00 : f32
    %45 = vector.broadcast %cst_21 : f32 to vector<8x32xf32>
    %46 = arith.select %40, %45, %38 : vector<8x32xi1>, vector<8x32xf32>
    %47 = vector.extract_strided_slice %5 {offsets = [24, 0], sizes = [8, 32], strides = [1, 1]} : vector<64x32xf32> to vector<8x32xf32>
    %48 = arith.subf %47, %46 : vector<8x32xf32>
    %cst_22 = arith.constant 5.000000e-01 : f32
    %49 = vector.broadcast %cst_22 : f32 to vector<8x32xf32>
    %50 = arith.mulf %48, %49 : vector<8x32xf32>
    %51 = arith.addf %46, %50 : vector<8x32xf32>
    %cst_23 = arith.constant 1.000000e+00 : f32
    %52 = vector.broadcast %cst_23 : f32 to vector<8x32xf32>
    %53 = arith.cmpf oge, %51, %52 : vector<8x32xf32>
    %cst_24 = arith.constant 1.000000e+00 : f32
    %cst_25 = arith.constant 0.000000e+00 : f32
    %54 = vector.broadcast %cst_24 : f32 to vector<8x32xf32>
    %55 = vector.broadcast %cst_25 : f32 to vector<8x32xf32>
    %56 = arith.select %53, %54, %55 : vector<8x32xi1>, vector<8x32xf32>
    %57 = arith.addf %44, %56 : vector<8x32xf32>
    %cst_26 = arith.constant 0.000000e+00 : f32
    %58 = vector.broadcast %cst_26 : f32 to vector<8x32xf32>
    %59 = arith.select %53, %58, %51 : vector<8x32xi1>, vector<8x32xf32>
    %60 = vector.extract_strided_slice %5 {offsets = [32, 0], sizes = [8, 32], strides = [1, 1]} : vector<64x32xf32> to vector<8x32xf32>
    %61 = arith.subf %60, %59 : vector<8x32xf32>
    %cst_27 = arith.constant 5.000000e-01 : f32
    %62 = vector.broadcast %cst_27 : f32 to vector<8x32xf32>
    %63 = arith.mulf %61, %62 : vector<8x32xf32>
    %64 = arith.addf %59, %63 : vector<8x32xf32>
    %cst_28 = arith.constant 1.000000e+00 : f32
    %65 = vector.broadcast %cst_28 : f32 to vector<8x32xf32>
    %66 = arith.cmpf oge, %64, %65 : vector<8x32xf32>
    %cst_29 = arith.constant 1.000000e+00 : f32
    %cst_30 = arith.constant 0.000000e+00 : f32
    %67 = vector.broadcast %cst_29 : f32 to vector<8x32xf32>
    %68 = vector.broadcast %cst_30 : f32 to vector<8x32xf32>
    %69 = arith.select %66, %67, %68 : vector<8x32xi1>, vector<8x32xf32>
    %70 = arith.addf %57, %69 : vector<8x32xf32>
    %cst_31 = arith.constant 0.000000e+00 : f32
    %71 = vector.broadcast %cst_31 : f32 to vector<8x32xf32>
    %72 = arith.select %66, %71, %64 : vector<8x32xi1>, vector<8x32xf32>
    %73 = vector.extract_strided_slice %5 {offsets = [40, 0], sizes = [8, 32], strides = [1, 1]} : vector<64x32xf32> to vector<8x32xf32>
    %74 = arith.subf %73, %72 : vector<8x32xf32>
    %cst_32 = arith.constant 5.000000e-01 : f32
    %75 = vector.broadcast %cst_32 : f32 to vector<8x32xf32>
    %76 = arith.mulf %74, %75 : vector<8x32xf32>
    %77 = arith.addf %72, %76 : vector<8x32xf32>
    %cst_33 = arith.constant 1.000000e+00 : f32
    %78 = vector.broadcast %cst_33 : f32 to vector<8x32xf32>
    %79 = arith.cmpf oge, %77, %78 : vector<8x32xf32>
    %cst_34 = arith.constant 1.000000e+00 : f32
    %cst_35 = arith.constant 0.000000e+00 : f32
    %80 = vector.broadcast %cst_34 : f32 to vector<8x32xf32>
    %81 = vector.broadcast %cst_35 : f32 to vector<8x32xf32>
    %82 = arith.select %79, %80, %81 : vector<8x32xi1>, vector<8x32xf32>
    %83 = arith.addf %70, %82 : vector<8x32xf32>
    %cst_36 = arith.constant 0.000000e+00 : f32
    %84 = vector.broadcast %cst_36 : f32 to vector<8x32xf32>
    %85 = arith.select %79, %84, %77 : vector<8x32xi1>, vector<8x32xf32>
    %86 = vector.extract_strided_slice %5 {offsets = [48, 0], sizes = [8, 32], strides = [1, 1]} : vector<64x32xf32> to vector<8x32xf32>
    %87 = arith.subf %86, %85 : vector<8x32xf32>
    %cst_37 = arith.constant 5.000000e-01 : f32
    %88 = vector.broadcast %cst_37 : f32 to vector<8x32xf32>
    %89 = arith.mulf %87, %88 : vector<8x32xf32>
    %90 = arith.addf %85, %89 : vector<8x32xf32>
    %cst_38 = arith.constant 1.000000e+00 : f32
    %91 = vector.broadcast %cst_38 : f32 to vector<8x32xf32>
    %92 = arith.cmpf oge, %90, %91 : vector<8x32xf32>
    %cst_39 = arith.constant 1.000000e+00 : f32
    %cst_40 = arith.constant 0.000000e+00 : f32
    %93 = vector.broadcast %cst_39 : f32 to vector<8x32xf32>
    %94 = vector.broadcast %cst_40 : f32 to vector<8x32xf32>
    %95 = arith.select %92, %93, %94 : vector<8x32xi1>, vector<8x32xf32>
    %96 = arith.addf %83, %95 : vector<8x32xf32>
    %cst_41 = arith.constant 0.000000e+00 : f32
    %97 = vector.broadcast %cst_41 : f32 to vector<8x32xf32>
    %98 = arith.select %92, %97, %90 : vector<8x32xi1>, vector<8x32xf32>
    %99 = vector.extract_strided_slice %5 {offsets = [56, 0], sizes = [8, 32], strides = [1, 1]} : vector<64x32xf32> to vector<8x32xf32>
    %100 = arith.subf %99, %98 : vector<8x32xf32>
    %cst_42 = arith.constant 5.000000e-01 : f32
    %101 = vector.broadcast %cst_42 : f32 to vector<8x32xf32>
    %102 = arith.mulf %100, %101 : vector<8x32xf32>
    %103 = arith.addf %98, %102 : vector<8x32xf32>
    %cst_43 = arith.constant 1.000000e+00 : f32
    %104 = vector.broadcast %cst_43 : f32 to vector<8x32xf32>
    %105 = arith.cmpf oge, %103, %104 : vector<8x32xf32>
    %cst_44 = arith.constant 1.000000e+00 : f32
    %cst_45 = arith.constant 0.000000e+00 : f32
    %106 = vector.broadcast %cst_44 : f32 to vector<8x32xf32>
    %107 = vector.broadcast %cst_45 : f32 to vector<8x32xf32>
    %108 = arith.select %105, %106, %107 : vector<8x32xi1>, vector<8x32xf32>
    %109 = arith.addf %96, %108 : vector<8x32xf32>
    %cst_46 = arith.constant 1.250000e-01 : f32
    %110 = vector.broadcast %cst_46 : f32 to vector<8x32xf32>
    %111 = arith.mulf %109, %110 : vector<8x32xf32>
    %c0_47 = arith.constant 0 : index
    %c0_48 = arith.constant 0 : index
    %112 = vector.load %arg3[%c0_47, %c0_48] : memref<32x128xf32, #tpu.memory_space<vmem>>, vector<32x128xf32>
    %cst_49 = arith.constant dense<0.000000e+00> : vector<8x128xf32>
    %113 = tpu.matmul %111, %112, %cst_49 {dimension_numbers = #tpu.dot_dimension_numbers<[1], [0], [0], [1], [0, 0, 1, 1], [], []>} : vector<8x32xf32>, vector<32x128xf32>, vector<8x128xf32> -> vector<8x128xf32>
    %c0_50 = arith.constant 0 : index
    %c0_51 = arith.constant 0 : index
    %114 = vector.load %arg4[%c0_50, %c0_51] : memref<1x128xf32, #tpu.memory_space<vmem>>, vector<1x128xf32>
    %115 = vector.broadcast %114 : vector<1x128xf32> to vector<8x128xf32>
    %116 = arith.addf %113, %115 : vector<8x128xf32>
    %cst_52 = arith.constant dense<0xFF800000> : vector<8xf32>
    %117 = vector.multi_reduction <maximumf>, %116, %cst_52 [1] : vector<8x128xf32> to vector<8xf32>
    %118 = vector.shape_cast %117 : vector<8xf32> to vector<8x1xf32>
    %119 = vector.broadcast %118 : vector<8x1xf32> to vector<8x128xf32>
    %120 = arith.subf %116, %119 : vector<8x128xf32>
    %121 = math.exp %120 : vector<8x128xf32>
    %cst_53 = arith.constant dense<0.000000e+00> : vector<8xf32>
    %122 = vector.multi_reduction <add>, %121, %cst_53 [1] : vector<8x128xf32> to vector<8xf32>
    %123 = vector.shape_cast %122 : vector<8xf32> to vector<8x1xf32>
    %124 = math.log %123 : vector<8x1xf32>
    %125 = vector.broadcast %124 : vector<8x1xf32> to vector<8x128xf32>
    %126 = arith.subf %120, %125 : vector<8x128xf32>
    %c0_54 = arith.constant 0 : index
    %c0_55 = arith.constant 0 : index
    %127 = vector.load %arg5[%c0_54, %c0_55] : memref<8x128xf32, #tpu.memory_space<vmem>>, vector<8x128xf32>
    tpu.vector_store %arg5[%c0_54, %c0_55], %126 {strides = array<i32>} : memref<8x128xf32, #tpu.memory_space<vmem>>, vector<8x128xf32>,
    return
  }
}

</mosaic_0001>

<llo_original>
// kernel: clf_block_forward.1
$region0: #{clf_block_forward.1}
  #allocation0 [shape = 'u32[]', space=smem, size = 0x4, offset = 0x4, fixed_abs, tag = 'smem constant byte address 0x4 - core index']
  #allocation1 [shape = 'u32[144,128]{1,0:T(1,128)}', space=vmem, size = 0x12000, scoped, tag = 'internal scratch']
  %s0 = inlined_call_operand.vmem [shape: f32[64,32], index: 0, kind: input, shape index: {}]
  %s1 = inlined_call_operand.vmem [shape: f32[32,32], index: 1, kind: input, shape index: {}]
  %s2 = inlined_call_operand.vmem [shape: f32[1,32], index: 2, kind: input, shape index: {}]
  %s3 = inlined_call_operand.vmem [shape: f32[32,128], index: 3, kind: input, shape index: {}]
  %s4 = inlined_call_operand.vmem [shape: f32[1,128], index: 4, kind: input, shape index: {}]
  %s5 = inlined_call_operand.vmem [shape: f32[8,128], index: 5, kind: output, shape index: {}]
  %s6 = sld [smem:[#allocation0]]
  $region30: #{clf_block_forward.1} parent=0
    _
  %s8 = ssub.s32 1, %s6
  %s9 = scalar_select 0, %s8, %s6
  // Predicated region
  $region2: #{clf_block_forward.1} parent=0 // pred_check
    _
  $region3: #{clf_block_forward.1} parent=0 // pred_check_branch
    %11 = sbr.rel (0) target = $region5
  $region4: #{clf_block_forward.1} parent=0 // pred_region
    _
  $region5: #{clf_block_forward.1} parent=0 // pred_fallthru
    _
  // Predicated region
  $region6: #{clf_block_forward.1} parent=0 // pred_check
    _
  $region7: #{clf_block_forward.1} parent=0 // pred_check_branch
    %13 = sbr.rel (0) target = $region9
  $region8: #{clf_block_forward.1} parent=0 // pred_region
    _
  $region9: #{clf_block_forward.1} parent=0 // pred_fallthru
    _
  // Predicated region
  $region10: #{clf_block_forward.1} parent=0 // pred_check
    _
  $region11: #{clf_block_forward.1} parent=0 // pred_check_branch
    %15 = sbr.rel (0) target = $region13
  $region12: #{clf_block_forward.1} parent=0 // pred_region
    _
  $region13: #{clf_block_forward.1} parent=0 // pred_fallthru
    _
  // Predicated region
  $region14: #{clf_block_forward.1} parent=0 // pred_check
    _
  $region15: #{clf_block_forward.1} parent=0 // pred_check_branch
    %17 = sbr.rel (0) target = $region17
  $region16: #{clf_block_forward.1} parent=0 // pred_region
    _
  $region17: #{clf_block_forward.1} parent=0 // pred_fallthru
    _
  // Predicated region
  $region18: #{clf_block_forward.1} parent=0 // pred_check
    _
  $region19: #{clf_block_forward.1} parent=0 // pred_check_branch
    %19 = sbr.rel (0) target = $region21
  $region20: #{clf_block_forward.1} parent=0 // pred_region
    _
  $region21: #{clf_block_forward.1} parent=0 // pred_fallthru
    _
  %v20 = vld [vmem:[%s0] sm:$0xff]
  %v21 = vld [vmem:[%s0 + $0x8] sm:$0xff]
  %v22 = vld [vmem:[%s0 + $0x10] sm:$0xff]
  %v23 = vld [vmem:[%s0 + $0x18] sm:$0xff]
  %v24 = vld [vmem:[%s0 + $0x20] sm:$0xff]
  %v25 = vld [vmem:[%s0 + $0x28] sm:$0xff]
  %v26 = vld [vmem:[%s0 + $0x30] sm:$0xff]
  %v27 = vld [vmem:[%s0 + $0x38] sm:$0xff]
  %v28 = vld [vmem:[%s1] sm:$0xff]
  %v29 = vld [vmem:[%s1 + $0x8] sm:$0xff]
  %v30 = vld [vmem:[%s1 + $0x10] sm:$0xff]
  %v31 = vld [vmem:[%s1 + $0x18] sm:$0xff]
  %v32 = vld [vmem:[%s2] sm:$0x1]
  %v34 = vlaneseq
  %v35 = vshrl.u32 %v34, 7
  %v36 = vsub.s32 0, %v35
  %v37 = vrot.slane %v32, %v36
  %vm39 = vcmask 261120
  %v41 = vsel %vm39, %v20, 0
  %v44 = vsel %vm39, %v21, 0
  %v47 = vsel %vm39, %v22, 0
  %v50 = vsel %vm39, %v23, 0
  %v53 = vsel %vm39, %v24, 0
  %v56 = vsel %vm39, %v25, 0
  %v59 = vsel %vm39, %v26, 0
  %v62 = vsel %vm39, %v27, 0
  %64 = vmatprep.subr.mxu0 0.0
  %65 = vmatpush1.msra.mxu0 0.0
  %66 = vmatprep.subr.mxu0 0.0
  %67 = vmatpush1.msra.mxu0 0.0
  %68 = vmatprep.subr.mxu0 0.0
  %69 = vmatpush1.msra.mxu0 0.0
  %70 = vmatprep.subr.mxu0 0.0
  %71 = vmatpush1.msra.mxu0 0.0
  %72 = vmatprep.subr.mxu0 0.0
  %73 = vmatpush1.msra.mxu0 0.0
  %74 = vmatprep.subr.mxu0 0.0
  %75 = vmatpush1.msra.mxu0 0.0
  %76 = vmatprep.subr.mxu0 0.0
  %77 = vmatpush1.msra.mxu0 0.0
  %78 = vmatprep.subr.mxu0 0.0
  %79 = vmatpush1.msra.mxu0 0.0
  %80 = vmatprep.subr.mxu0 0.0
  %81 = vmatpush1.msra.mxu0 0.0
  %82 = vmatprep.subr.mxu0 0.0
  %83 = vmatpush1.msra.mxu0 0.0
  %84 = vmatprep.subr.mxu0 0.0
  %85 = vmatpush1.msra.mxu0 0.0
  %86 = vmatprep.subr.mxu0 0.0
  %87 = vmatpush1.msra.mxu0 0.0
  %88 = vmatprep.subr.mxu0 0.0
  %89 = vmatpush1.msra.mxu0 %v31
  %90 = vmatprep.subr.mxu0 0.0
  %91 = vmatpush1.msra.mxu0 %v30
  %92 = vmatprep.subr.mxu0 0.0
  %93 = vmatpush1.msra.mxu0 %v29
  %94 = vmatprep.subr.mxu0 0.0
  %95 = vmatpush1.msra.mxu0 %v28
  %96 = vmatprep.subr.mxu0 0.0
  %97 = vmatpush2.msra.mxu0 0.0
  %98 = vmatprep.subr.mxu0 0.0
  %99 = vmatpush2.msra.mxu0 0.0
  %100 = vmatprep.subr.mxu0 0.0
  %101 = vmatpush2.msra.mxu0 0.0
  %102 = vmatprep.subr.mxu0 0.0
  %103 = vmatpush2.msra.mxu0 0.0
  %104 = vmatprep.subr.mxu0 0.0
  %105 = vmatpush2.msra.mxu0 0.0
  %106 = vmatprep.subr.mxu0 0.0
  %107 = vmatpush2.msra.mxu0 0.0
  %108 = vmatprep.subr.mxu0 0.0
  %109 = vmatpush2.msra.mxu0 0.0
  %110 = vmatprep.subr.mxu0 0.0
  %111 = vmatpush2.msra.mxu0 0.0
  %112 = vmatprep.subr.mxu0 0.0
  %113 = vmatpush2.msra.mxu0 0.0
  %114 = vmatprep.subr.mxu0 0.0
  %115 = vmatpush2.msra.mxu0 0.0
  %116 = vmatprep.subr.mxu0 0.0
  %117 = vmatpush2.msra.mxu0 0.0
  %118 = vmatprep.subr.mxu0 0.0
  %119 = vmatpush2.msra.mxu0 0.0
  %120 = vmatprep.subr.mxu0 0.0
  %121 = vmatpush2.msra.mxu0 0.0
  %122 = vmatprep.subr.mxu0 0.0
  %123 = vmatpush2.msra.mxu0 0.0
  %124 = vmatprep.subr.mxu0 0.0
  %125 = vmatpush2.msra.mxu0 0.0
  %126 = vmatprep.subr.mxu0 0.0
  %127 = vmatpush2.msra.mxu0 0.0
  %128 = vmatprep.mubr.f32.mxu0 0.0
  %129 = vmatmul.mubr.f32.gmra.mxu0 %v41
  %v130 = vpop.f32.mrf.mxu0
  %v131 = vadd.f32 %v37, %v130
  %v132 = vpop.f32.mrf.mxu0
  %133 = vmatprep.mubr.f32.mxu0 0.0
  %134 = vmatmul.mubr.f32.gmra.mxu0 %v44
  %v135 = vpop.f32.mrf.mxu0
  %v136 = vadd.f32 %v37, %v135
  %v137 = vpop.f32.mrf.mxu0
  %138 = vmatprep.mubr.f32.mxu0 0.0
  %139 = vmatmul.mubr.f32.gmra.mxu0 %v47
  %v140 = vpop.f32.mrf.mxu0
  %v141 = vadd.f32 %v37, %v140
  %v142 = vpop.f32.mrf.mxu0
  %143 = vmatprep.mubr.f32.mxu0 0.0
  %144 = vmatmul.mubr.f32.gmra.mxu0 %v50
  %v145 = vpop.f32.mrf.mxu0
  %v146 = vadd.f32 %v37, %v145
  %v147 = vpop.f32.mrf.mxu0
  %148 = vmatprep.mubr.f32.mxu0 0.0
  %149 = vmatmul.mubr.f32.gmra.mxu0 %v53
  %v150 = vpop.f32.mrf.mxu0
  %v151 = vadd.f32 %v37, %v150
  %v152 = vpop.f32.mrf.mxu0
  %153 = vmatprep.mubr.f32.mxu0 0.0
  %154 = vmatmul.mubr.f32.gmra.mxu0 %v56
  %v155 = vpop.f32.mrf.mxu0
  %v156 = vadd.f32 %v37, %v155
  %v157 = vpop.f32.mrf.mxu0
  %158 = vmatprep.mubr.f32.mxu0 0.0
  %159 = vmatmul.mubr.f32.gmra.mxu0 %v59
  %v160 = vpop.f32.mrf.mxu0
  %v161 = vadd.f32 %v37, %v160
  %v162 = vpop.f32.mrf.mxu0
  %163 = vmatprep.mubr.f32.mxu0 0.0
  %164 = vmatmul.mubr.f32.gmra.mxu0 %v62
  %v165 = vpop.f32.mrf.mxu0
  %v166 = vadd.f32 %v37, %v165
  %v167 = vpop.f32.mrf.mxu0
  %168 = vdwg.mxu0
  %v169 = vmul.f32 %v131, 0.5
  %v170 = vadd.f32 %v169, 0.0
  %vm171 = vcmp.ge.f32.partialorder %v170, 1.0
  %v172 = vsel %vm171, 1.0, 0.0
  %v173 = vadd.f32 %v172, 0.0
  %v174 = vsel %vm171, 0.0, %v170
  %v175 = vsub.f32 %v136, %v174
  %v176 = vmul.f32 %v175, 0.5
  %v177 = vadd.f32 %v174, %v176
  %vm178 = vcmp.ge.f32.partialorder %v177, 1.0
  %v179 = vsel %vm178, 1.0, 0.0
  %v180 = vadd.f32 %v173, %v179
  %v181 = vsel %vm178, 0.0, %v177
  %v182 = vsub.f32 %v141, %v181
  %v183 = vmul.f32 %v182, 0.5
  %v184 = vadd.f32 %v181, %v183
  %vm185 = vcmp.ge.f32.partialorder %v184, 1.0
  %v186 = vsel %vm185, 1.0, 0.0
  %v187 = vadd.f32 %v180, %v186
  %v188 = vsel %vm185, 0.0, %v184
  %v189 = vsub.f32 %v146, %v188
  %v190 = vmul.f32 %v189, 0.5
  %v191 = vadd.f32 %v188, %v190
  %vm192 = vcmp.ge.f32.partialorder %v191, 1.0
  %v193 = vsel %vm192, 1.0, 0.0
  %v194 = vadd.f32 %v187, %v193
  %v195 = vsel %vm192, 0.0, %v191
  %v196 = vsub.f32 %v151, %v195
  %v197 = vmul.f32 %v196, 0.5
  %v198 = vadd.f32 %v195, %v197
  %vm199 = vcmp.ge.f32.partialorder %v198, 1.0
  %v200 = vsel %vm199, 1.0, 0.0
  %v201 = vadd.f32 %v194, %v200
  %v202 = vsel %vm199, 0.0, %v198
  %v203 = vsub.f32 %v156, %v202
  %v204 = vmul.f32 %v203, 0.5
  %v205 = vadd.f32 %v202, %v204
  %vm206 = vcmp.ge.f32.partialorder %v205, 1.0
  %v207 = vsel %vm206, 1.0, 0.0
  %v208 = vadd.f32 %v201, %v207
  %v209 = vsel %vm206, 0.0, %v205
  %v210 = vsub.f32 %v161, %v209
  %v211 = vmul.f32 %v210, 0.5
  %v212 = vadd.f32 %v209, %v211
  %vm213 = vcmp.ge.f32.partialorder %v212, 1.0
  %v214 = vsel %vm213, 1.0, 0.0
  %v215 = vadd.f32 %v208, %v214
  %v216 = vsel %vm213, 0.0, %v212
  %v217 = vsub.f32 %v166, %v216
  %v218 = vmul.f32 %v217, 0.5
  %v219 = vadd.f32 %v216, %v218
  %vm220 = vcmp.ge.f32.partialorder %v219, 1.0
  %v221 = vsel %vm220, 1.0, 0.0
  %v222 = vadd.f32 %v215, %v221
  %v223 = vmul.f32 %v222, 0.125
  %v224 = vld [vmem:[%s3] sm:$0xff]
  %v225 = vld [vmem:[%s3 + $0x8] sm:$0xff]
  %v226 = vld [vmem:[%s3 + $0x10] sm:$0xff]
  %v227 = vld [vmem:[%s3 + $0x18] sm:$0xff]
  %v228 = vld [vmem:[%s4] sm:$0x1]
  %v230 = vlaneseq
  %v231 = vshrl.u32 %v230, 7
  %v232 = vsub.s32 0, %v231
  %v233 = vrot.slane %v228, %v232
  %v236 = vsel %vm39, %v223, 0
  %238 = vmatprep.subr.mxu0 0.0
  %239 = vmatpush1.msra.mxu0 0.0
  %240 = vmatprep.subr.mxu0 0.0
  %241 = vmatpush1.msra.mxu0 0.0
  %242 = vmatprep.subr.mxu0 0.0
  %243 = vmatpush1.msra.mxu0 0.0
  %244 = vmatprep.subr.mxu0 0.0
  %245 = vmatpush1.msra.mxu0 0.0
  %246 = vmatprep.subr.mxu0 0.0
  %247 = vmatpush1.msra.mxu0 0.0
  %248 = vmatprep.subr.mxu0 0.0
  %249 = vmatpush1.msra.mxu0 0.0
  %250 = vmatprep.subr.mxu0 0.0
  %251 = vmatpush1.msra.mxu0 0.0
  %252 = vmatprep.subr.mxu0 0.0
  %253 = vmatpush1.msra.mxu0 0.0
  %254 = vmatprep.subr.mxu0 0.0
  %255 = vmatpush1.msra.mxu0 0.0
  %256 = vmatprep.subr.mxu0 0.0
  %257 = vmatpush1.msra.mxu0 0.0
  %258 = vmatprep.subr.mxu0 0.0
  %259 = vmatpush1.msra.mxu0 0.0
  %260 = vmatprep.subr.mxu0 0.0
  %261 = vmatpush1.msra.mxu0 0.0
  %262 = vmatprep.subr.mxu0 0.0
  %263 = vmatpush1.msra.mxu0 %v227
  %264 = vmatprep.subr.mxu0 0.0
  %265 = vmatpush1.msra.mxu0 %v226
  %266 = vmatprep.subr.mxu0 0.0
  %267 = vmatpush1.msra.mxu0 %v225
  %268 = vmatprep.subr.mxu0 0.0
  %269 = vmatpush1.msra.mxu0 %v224
  %270 = vmatprep.subr.mxu0 0.0
  %271 = vmatpush2.msra.mxu0 0.0
  %272 = vmatprep.subr.mxu0 0.0
  %273 = vmatpush2.msra.mxu0 0.0
  %274 = vmatprep.subr.mxu0 0.0
  %275 = vmatpush2.msra.mxu0 0.0
  %276 = vmatprep.subr.mxu0 0.0
  %277 = vmatpush2.msra.mxu0 0.0
  %278 = vmatprep.subr.mxu0 0.0
  %279 = vmatpush2.msra.mxu0 0.0
  %280 = vmatprep.subr.mxu0 0.0
  %281 = vmatpush2.msra.mxu0 0.0
  %282 = vmatprep.subr.mxu0 0.0
  %283 = vmatpush2.msra.mxu0 0.0
  %284 = vmatprep.subr.mxu0 0.0
  %285 = vmatpush2.msra.mxu0 0.0
  %286 = vmatprep.subr.mxu0 0.0
  %287 = vmatpush2.msra.mxu0 0.0
  %288 = vmatprep.subr.mxu0 0.0
  %289 = vmatpush2.msra.mxu0 0.0
  %290 = vmatprep.subr.mxu0 0.0
  %291 = vmatpush2.msra.mxu0 0.0
  %292 = vmatprep.subr.mxu0 0.0
  %293 = vmatpush2.msra.mxu0 0.0
  %294 = vmatprep.subr.mxu0 0.0
  %295 = vmatpush2.msra.mxu0 0.0
  %296 = vmatprep.subr.mxu0 0.0
  %297 = vmatpush2.msra.mxu0 0.0
  %298 = vmatprep.subr.mxu0 0.0
  %299 = vmatpush2.msra.mxu0 0.0
  %300 = vmatprep.subr.mxu0 0.0
  %301 = vmatpush2.msra.mxu0 0.0
  %302 = vmatprep.mubr.f32.mxu0 0.0
  %303 = vmatmul.mubr.f32.gmra.mxu0 %v236
  %v304 = vpop.f32.mrf.mxu0
  %v305 = vadd.f32 %v233, %v304
  %v306 = vpop.f32.mrf.mxu0
  %307 = vdwg.mxu0
  %308 = vmax.xlane.f32.xlu0 %v305
  %v309 = vpop.xlane.xlu0 %308
  %v310 = vsub.f32 %v305, %v309
  %v311 = vmul.f32 %v310, 1.442695
  %v312 = vpow.pop %v311
  %313 = vadd.xlane.f32.xlu0 %v312
  %v314 = vpop.xlane.xlu0 %313
  %v315 = vlog2.pop %v314
  %v316 = vmul.f32 %v315, 0.6931472
  %v317 = vsub.f32 %v310, %v316
  %318 = vst [vmem:[%s5] sm:$0xff] %v317
  // Predicated region
  $region22: #{clf_block_forward.1} parent=0 // pred_check
    _
  $region23: #{clf_block_forward.1} parent=0 // pred_check_branch
    %320 = sbr.rel (0) target = $region25
  $region24: #{clf_block_forward.1} parent=0 // pred_region
    _
  $region25: #{clf_block_forward.1} parent=0 // pred_fallthru
    _
  // Predicated region
  $region26: #{clf_block_forward.1} parent=0 // pred_check
    _
  $region27: #{clf_block_forward.1} parent=0 // pred_check_branch
    %322 = sbr.rel (0) target = $region29
  $region28: #{clf_block_forward.1} parent=0 // pred_region
    _
  $region29: #{clf_block_forward.1} parent=0 // pred_fallthru
    _

</llo_original>
